<compile_context>
chip_gen: v7x
topology: tpu7x:2x2x1
jax: 0.10.0
libtpu: 0.0.40
codegen_flags: <defaults>
</compile_context>

<pallas_src>
import jax
import jax.numpy as jnp
from jax.experimental import pallas as pl
from jax.experimental.pallas import tpu as pltpu

LANE = 128
SUBLANE = 8
_TILE_ELEMS = SUBLANE * LANE          # one (8,128) sub-tile = 1024 elements
_N_CORE_SPLIT = 2                     # use both TensorCores on v7x; harmless elsewhere


def _make_rec_kernel(*, tm, chunk, m_valid, spc, num_blocks, needs_partial, has_dup):
    """Build the reconstruction-loss reduction kernel for one configuration."""
    num_chunks = tm // chunk
    any_mask = needs_partial or has_dup
    # Blocks with logical index >= mask_from may contain rows that must be masked
    # (the partial last block and/or the fully-out-of-range duplicate step).
    mask_from = (num_blocks - 1) if needs_partial else num_blocks

    def kernel(x_ref, md_ref, sd_ref, o_ref, acc_ref):
        c = pl.program_id(0)          # core-split axis ("parallel")
        i = pl.program_id(1)          # reduction axis   ("arbitrary")

        # Zero this core's vector accumulator at the start of its reduction.
        @pl.when(i == 0)
        def _init():
            acc_ref[...] = jnp.zeros_like(acc_ref)

        blk = c * spc + i             # logical row-block index (may equal num_blocks
                                      # for the single duplicate step when odd)

        def accumulate(masked):
            def chunk_body(j, carry):
                if isinstance(j, int):
                    r0 = j * chunk
                else:
                    r0 = pl.multiple_of(j * chunk, chunk)
                xs = x_ref[pl.ds(r0, chunk), :].astype(jnp.float32)
                ms = md_ref[pl.ds(r0, chunk), :].astype(jnp.float32)
                ss = sd_ref[pl.ds(r0, chunk), :].astype(jnp.float32)
                var = ss * ss
                diff = xs - ms
                # log(var) + diff^2 / (var + 1e-8); the global 0.5 is applied once
                # at the final scalar write.  (No eps inside log, matching the spec.)
                rec = jnp.log(var) + diff * diff * pl.reciprocal(var + 1e-8,
                                                                 approx=False)
                if masked:
                    rows = (blk * tm + r0
                            + jax.lax.broadcasted_iota(jnp.int32, rec.shape, 0))
                    rec = jnp.where(rows < m_valid, rec, 0.0)
                # Reduce the chunk down to one (8,128) vreg tile (pure VPU adds).
                acc_ref[...] += rec.reshape(-1, SUBLANE, LANE).sum(axis=0)
                return carry

            if num_chunks == 1:
                chunk_body(0, 0)
            else:
                jax.lax.fori_loop(0, num_chunks, chunk_body, 0,
                                  unroll=num_chunks <= 8)

        if any_mask:
            # Fast unmasked path for interior blocks; masked path only for the
            # edge (partial / duplicate) blocks.
            @pl.when(blk < mask_from)
            def _interior():
                accumulate(masked=False)

            @pl.when(blk >= mask_from)
            def _edge():
                accumulate(masked=True)
        else:
            accumulate(masked=False)

        # One cross-lane reduce + scalar SMEM write per core, at its last step.
        @pl.when(i == spc - 1)
        def _finalize():
            o_ref[0, 0] = 0.5 * jnp.sum(acc_ref[...])

    return kernel


def gaussian_loss(x, mean_encoder, std_encoder, mean_decoder, std_decoder, *, tm=4096):
    n = int(x.size)

    # Pad only up to one (8,128) sub-tile with neutral values (x=0, mean=0, std=1
    # -> contributes exactly 0).  When n is already 1024-aligned this is copy-free.
    n_pad = -(-n // _TILE_ELEMS) * _TILE_ELEMS
    M = n_pad // LANE                  # number of 128-lane rows (multiple of 8)
    pad = n_pad - n

    def _flat2d(a, fill):
        flat = a.reshape(-1)           # keep native dtype; no upcast in the wrapper
        if pad:
            flat = jnp.concatenate(
                [flat, jnp.full((pad,), fill, dtype=flat.dtype)])
        return flat.reshape(M, LANE)

    xf = _flat2d(x, 0)
    mdf = _flat2d(mean_decoder, 0)
    sdf = _flat2d(std_decoder, 1)

    tm_eff = min(tm, M)                          # both multiples of 8
    num_blocks = -(-M // tm_eff)                 # cdiv
    n_split = _N_CORE_SPLIT if num_blocks >= 2 else 1
    spc = -(-num_blocks // n_split)              # reduction steps per core
    chunk = 256 if tm_eff % 256 == 0 else tm_eff # strip-mine rows per inner step
    needs_partial = (M % tm_eff) != 0            # last real block only partly valid
    has_dup = n_split * spc > num_blocks         # one fully-invalid duplicate step

    kernel = _make_rec_kernel(tm=tm_eff, chunk=chunk, m_valid=M, spc=spc,
                              num_blocks=num_blocks,
                              needs_partial=needs_partial, has_dup=has_dup)

    if has_dup:
        # Clamp the duplicate step onto the last real block (its contribution is
        # masked to zero inside the kernel); keeps the DMA in bounds.
        def in_map(c, i):
            return (jnp.minimum(c * spc + i, num_blocks - 1), 0)
    else:
        def in_map(c, i):
            return (c * spc + i, 0)

    in_spec = pl.BlockSpec((tm_eff, LANE), in_map)

    partials = pl.pallas_call(
        kernel,
        out_shape=jax.ShapeDtypeStruct((n_split, 1), jnp.float32),
        grid_spec=pltpu.PrefetchScalarGridSpec(
            num_scalar_prefetch=0,
            grid=(n_split, spc),
            in_specs=[in_spec, in_spec, in_spec],       # x, mean_decoder, std_decoder
            out_specs=pl.BlockSpec((1, 1), lambda c, i: (c, 0),
                                   memory_space=pltpu.MemorySpace.SMEM),
            scratch_shapes=[pltpu.VMEM((SUBLANE, LANE), jnp.float32)],
        ),
        compiler_params=pltpu.CompilerParams(
            dimension_semantics=("parallel", "arbitrary"),
            vmem_limit_bytes=32 * 1024 * 1024,   # 3 inputs x 2 bufs x 2 MiB = 12 MiB
        ),
    )(xf, mdf, sdf)

    rec_sum = jnp.sum(partials)

    # Tiny encoder regularizer ((B, latent)): plain JAX, not worth a kernel pass.
    me = mean_encoder.astype(jnp.float32)
    se = std_encoder.astype(jnp.float32)
    var_e = se * se
    reg_sum = jnp.sum(0.5 * (me * me + var_e - jnp.log(var_e + 1e-8) - 1.0))

    return rec_sum + reg_sum


def _reference(x, me, se, md, sd):
    x, me, se, md, sd = (a.astype(jnp.float32) for a in (x, me, se, md, sd))
    rec = 0.5 * jnp.log(sd ** 2) + 0.5 * ((x - md) ** 2 / (sd ** 2 + 1e-8))
    reg = 0.5 * (me ** 2 + se ** 2 - jnp.log(se ** 2 + 1e-8) - 1.0)
    return jnp.sum(rec) + jnp.sum(reg)


if __name__ == "__main__":
    key = jax.random.PRNGKey(0)
    k1, k2, k3, k4, k5 = jax.random.split(key, 5)

    B, C, H, W = 2, 4, 16, 16
    LATENT = 32

    x = jax.random.normal(k1, (B, C, H, W), jnp.float32)
    mean_decoder = jax.random.normal(k2, (B, C, H, W), jnp.float32)
    std_decoder = jax.random.uniform(k3, (B, C, H, W), jnp.float32, 0.5, 1.5)
    mean_encoder = jax.random.normal(k4, (B, LATENT), jnp.float32)
    std_encoder = jax.random.uniform(k5, (B, LATENT), jnp.float32, 0.5, 1.5)

    loss = gaussian_loss(x, mean_encoder, std_encoder, mean_decoder, std_decoder)
    loss = jax.block_until_ready(loss)
    ref = _reference(x, mean_encoder, std_encoder, mean_decoder, std_decoder)
    assert jnp.allclose(loss, ref, rtol=1e-5, atol=1e-4), (loss, ref)

    # Second check: a non-1024-aligned, multi-block shape that exercises the
    # core-split grid, the clamped duplicate step, the in-kernel tail mask and the
    # strip-mined fori_loop path (tm=512 -> 3 blocks across 2 "cores").
    k6, k7, k8 = jax.random.split(k5, 3)
    shape2 = (10, 128, 127)
    x2 = jax.random.normal(k6, shape2, jnp.float32)
    md2 = jax.random.normal(k7, shape2, jnp.float32)
    sd2 = jax.random.uniform(k8, shape2, jnp.float32, 0.5, 1.5)
    loss2 = gaussian_loss(x2, mean_encoder, std_encoder, md2, sd2, tm=512)
    loss2 = jax.block_until_ready(loss2)
    ref2 = _reference(x2, mean_encoder, std_encoder, md2, sd2)
    # Looser rtol: f32 summation order differs from jnp.sum over ~160k elements.
    assert jnp.allclose(loss2, ref2, rtol=5e-5, atol=1e-2), (loss2, ref2)

    print("KERNEL_OK")
</pallas_src>

<mosaic_0001>
module attributes {stable_mosaic.version = 11 : i64} {
  func.func @kernel(%arg0: i32, %arg1: i32, %arg2: memref<16x128xf32, #tpu.memory_space<vmem>>, %arg3: memref<16x128xf32, #tpu.memory_space<vmem>>, %arg4: memref<16x128xf32, #tpu.memory_space<vmem>>, %arg5: memref<1x1xf32, #tpu.memory_space<smem>>, %arg6: memref<8x128xf32, #tpu.memory_space<vmem>>) attributes {dimension_semantics = [#tpu.dimension_semantics<parallel>, #tpu.dimension_semantics<arbitrary>], iteration_bounds = array<i64: 1, 1>, scalar_prefetch = 0 : i64, scratch_operands = 1 : i64, tpu.core_type = #tpu.core_type<tc>, window_params = [{transform_indices = @transform_0, window_bounds = array<i64: 16, 128>}, {transform_indices = @transform_1, window_bounds = array<i64: 16, 128>}, {transform_indices = @transform_2, window_bounds = array<i64: 16, 128>}, {transform_indices = @transform_3, window_bounds = array<i64: 1, 1>}]} {
    %c0_i32 = arith.constant 0 : i32
    %0 = arith.cmpi eq, %arg1, %c0_i32 : i32
    %1 = arith.extui %0 : i1 to i32
    %c0_i32_0 = arith.constant 0 : i32
    %2 = arith.cmpi ne, %1, %c0_i32_0 : i32
    scf.if %2 {
      %cst_13 = arith.constant 0.000000e+00 : f32
      %23 = vector.broadcast %cst_13 : f32 to vector<8x128xf32>
      %c0_14 = arith.constant 0 : index
      %c0_15 = arith.constant 0 : index
      %24 = vector.load %arg6[%c0_14, %c0_15] : memref<8x128xf32, #tpu.memory_space<vmem>>, vector<8x128xf32>
      tpu.vector_store %arg6[%c0_14, %c0_15], %23 {strides = array<i32>} : memref<8x128xf32, #tpu.memory_space<vmem>>, vector<8x128xf32>,
    } else {
    }
    %c0 = arith.constant 0 : index
    %c0_1 = arith.constant 0 : index
    %3 = vector.load %arg2[%c0, %c0_1] : memref<16x128xf32, #tpu.memory_space<vmem>>, vector<16x128xf32>
    %c0_2 = arith.constant 0 : index
    %c0_3 = arith.constant 0 : index
    %4 = vector.load %arg3[%c0_2, %c0_3] : memref<16x128xf32, #tpu.memory_space<vmem>>, vector<16x128xf32>
    %c0_4 = arith.constant 0 : index
    %c0_5 = arith.constant 0 : index
    %5 = vector.load %arg4[%c0_4, %c0_5] : memref<16x128xf32, #tpu.memory_space<vmem>>, vector<16x128xf32>
    %6 = arith.mulf %5, %5 : vector<16x128xf32>
    %7 = arith.subf %3, %4 : vector<16x128xf32>
    %8 = math.log %6 : vector<16x128xf32>
    %9 = arith.mulf %7, %7 : vector<16x128xf32>
    %cst = arith.constant 9.99999993E-9 : f32
    %10 = vector.broadcast %cst : f32 to vector<16x128xf32>
    %11 = arith.addf %6, %10 : vector<16x128xf32>
    %12 = tpu.reciprocal %11 : vector<16x128xf32> -> vector<16x128xf32>
    %13 = arith.mulf %9, %12 : vector<16x128xf32>
    %14 = arith.addf %8, %13 : vector<16x128xf32>
    %c0_6 = arith.constant 0 : index
    %c0_7 = arith.constant 0 : index
    %15 = vector.load %arg6[%c0_6, %c0_7] : memref<8x128xf32, #tpu.memory_space<vmem>>, vector<8x128xf32>
    %16 = vector.shape_cast %14 : vector<16x128xf32> to vector<2x8x128xf32>
    %cst_8 = arith.constant dense<0.000000e+00> : vector<8x128xf32>
    %17 = vector.multi_reduction <add>, %16, %cst_8 [0] : vector<2x8x128xf32> to vector<8x128xf32>
    %18 = arith.addf %15, %17 : vector<8x128xf32>
    %c0_9 = arith.constant 0 : index
    %c0_10 = arith.constant 0 : index
    %19 = vector.load %arg6[%c0_9, %c0_10] : memref<8x128xf32, #tpu.memory_space<vmem>>, vector<8x128xf32>
    tpu.vector_store %arg6[%c0_9, %c0_10], %18 {strides = array<i32>} : memref<8x128xf32, #tpu.memory_space<vmem>>, vector<8x128xf32>,
    %c0_i32_11 = arith.constant 0 : i32
    %20 = arith.cmpi eq, %arg1, %c0_i32_11 : i32
    %21 = arith.extui %20 : i1 to i32
    %c0_i32_12 = arith.constant 0 : i32
    %22 = arith.cmpi ne, %21, %c0_i32_12 : i32
    scf.if %22 {
      %c0_13 = arith.constant 0 : index
      %c0_14 = arith.constant 0 : index
      %23 = vector.load %arg6[%c0_13, %c0_14] : memref<8x128xf32, #tpu.memory_space<vmem>>, vector<8x128xf32>
      %24 = vector.shape_cast %23 : vector<8x128xf32> to vector<1x8x128xf32>
      %cst_15 = arith.constant dense<0.000000e+00> : vector<1xf32>
      %25 = vector.multi_reduction <add>, %24, %cst_15 [1, 2] : vector<1x8x128xf32> to vector<1xf32>
      %26 = vector.shape_cast %25 : vector<1xf32> to vector<1x1x1xf32>
      %27 = vector.extract %26[0, 0, 0] : f32 from vector<1x1x1xf32>
      %cst_16 = arith.constant 5.000000e-01 : f32
      %28 = arith.mulf %cst_16, %27 : f32
      %c0_17 = arith.constant 0 : index
      %c0_18 = arith.constant 0 : index
      %29 = memref.load %arg5[%c0_17, %c0_18] : memref<1x1xf32, #tpu.memory_space<smem>>
      memref.store %28, %arg5[%c0_17, %c0_18] : memref<1x1xf32, #tpu.memory_space<smem>>
    } else {
    }
    return
  }
  func.func @transform_0(%arg0: i32, %arg1: i32) -> (i32, i32) {
    %c1_i32 = arith.constant 1 : i32
    %0 = arith.muli %arg0, %c1_i32 : i32
    %1 = arith.addi %0, %arg1 : i32
    %c0_i32 = arith.constant 0 : i32
    %c0_i32_0 = arith.constant 0 : i32
    return %1, %c0_i32 : i32, i32
  }
  func.func @transform_1(%arg0: i32, %arg1: i32) -> (i32, i32) {
    %c1_i32 = arith.constant 1 : i32
    %0 = arith.muli %arg0, %c1_i32 : i32
    %1 = arith.addi %0, %arg1 : i32
    %c0_i32 = arith.constant 0 : i32
    %c0_i32_0 = arith.constant 0 : i32
    return %1, %c0_i32 : i32, i32
  }
  func.func @transform_2(%arg0: i32, %arg1: i32) -> (i32, i32) {
    %c1_i32 = arith.constant 1 : i32
    %0 = arith.muli %arg0, %c1_i32 : i32
    %1 = arith.addi %0, %arg1 : i32
    %c0_i32 = arith.constant 0 : i32
    %c0_i32_0 = arith.constant 0 : i32
    return %1, %c0_i32 : i32, i32
  }
  func.func @transform_3(%arg0: i32, %arg1: i32) -> (i32, i32) {
    %c0_i32 = arith.constant 0 : i32
    %c0_i32_0 = arith.constant 0 : i32
    return %arg0, %c0_i32 : i32, i32
  }
}

</mosaic_0001>

<llo_original>
// kernel: tpu_custom_call.1
$region0: #{tpu_custom_call.1}
  #allocation0 [shape = 'u32[]', space=smem, size = 0x4, offset = 0x4, fixed_abs, tag = 'smem constant byte address 0x4 - core index']
  #allocation1 [shape = 'u32[144,128]{1,0:T(1,128)}', space=vmem, size = 0x12000, scoped, tag = 'internal scratch']
  #allocation2 [shape = 'f32[8,128]{1,0:T(8,128)}', space=vmem, size = 0x1000, scoped, tag = 'scratch operand']
  %s0 = inlined_call_operand.hbm [shape: f32[16,128], index: 0, kind: input, shape index: {}]
  %s1 = inlined_call_operand.hbm [shape: f32[16,128], index: 1, kind: input, shape index: {}]
  %s2 = inlined_call_operand.hbm [shape: f32[16,128], index: 2, kind: input, shape index: {}]
  %s3 = inlined_call_operand.hbm [shape: f32[1,1], index: 3, kind: output, shape index: {}]
  %s4 = sld [smem:[#allocation0]]
  $region42: #{tpu_custom_call.1} parent=0
    _
  %s6 = ssub.s32 1, %s4
  %s7 = scalar_select 0, %s6, %s4
  $region1: #{tpu_custom_call.1} parent=0
    #allocation3 [shape = 'u8[8192]{0}', space=vmem, size = 0x2000, scoped, tag = 'input window, operand 0, single buffered']
    #allocation4 [shape = 's32[1]{0}', space=sflag, size = 0x4, scoped, tag = 'scoped memory for tpu_custom_call.1']
    #allocation5 [shape = 's32[1]{0}', space=sflag, size = 0x4, scoped, tag = 'scoped memory for tpu_custom_call.1']
    #allocation6 [shape = 'u8[8192]{0}', space=vmem, size = 0x2000, scoped, tag = 'input window, operand 1, single buffered']
    #allocation7 [shape = 's32[1]{0}', space=sflag, size = 0x4, scoped, tag = 'scoped memory for tpu_custom_call.1']
    #allocation8 [shape = 'u8[8192]{0}', space=vmem, size = 0x2000, scoped, tag = 'input window, operand 2, single buffered']
    #allocation9 [shape = 'u8[512]{0}', space=smem, size = 0x200, scoped, tag = 'output window, operand 0, single buffered']
    %8 = vsyncpa [#allocation4], 0
    %9 = vsyncpa [#allocation7], 0
    %10 = vsyncpa [#allocation5], 0
    // Predicated region
    $region2: #{tpu_custom_call.1} parent=1 // pred_check
      _
    $region3: #{tpu_custom_call.1} parent=1 // pred_check_branch
      %12 = sbr.rel (0) target = $region5
    $region4: #{tpu_custom_call.1} parent=1 // pred_region
      %s13 = sadd.s32 0, 0
      %s14 = smul.u32 2, %s13
      %s16 = ssub.s32 256, 256
      %17 = vsyncadd [#allocation4], %s16
      %s18 = smul.addr %s14, 128
      %s19 = scalar_lea.hbm %s0, %s18
      %s20 = sshll.u32 [#allocation3], 4
      %s21 = int_to_ptr.vmem [resolvable:$true] %s20
      %26 = dma.hbm_to_vmem [thread:$0]  %s19, 256, %s21, [#allocation4], 128, 128, 8
    $region5: #{tpu_custom_call.1} parent=1 // pred_fallthru
      _
    // Predicated region
    $region6: #{tpu_custom_call.1} parent=1 // pred_check
      _
    $region7: #{tpu_custom_call.1} parent=1 // pred_check_branch
      %28 = sbr.rel (0) target = $region9
    $region8: #{tpu_custom_call.1} parent=1 // pred_region
      %s29 = sadd.s32 0, 0
      %s30 = smul.u32 2, %s29
      %s32 = ssub.s32 256, 256
      %33 = vsyncadd [#allocation7], %s32
      %s34 = smul.addr %s30, 128
      %s35 = scalar_lea.hbm %s1, %s34
      %s36 = sshll.u32 [#allocation6], 4
      %s37 = int_to_ptr.vmem [resolvable:$true] %s36
      %42 = dma.hbm_to_vmem [thread:$0]  %s35, 256, %s37, [#allocation7], 128, 128, 8
    $region9: #{tpu_custom_call.1} parent=1 // pred_fallthru
      _
    // Predicated region
    $region10: #{tpu_custom_call.1} parent=1 // pred_check
      _
    $region11: #{tpu_custom_call.1} parent=1 // pred_check_branch
      %44 = sbr.rel (0) target = $region13
    $region12: #{tpu_custom_call.1} parent=1 // pred_region
      %s45 = sadd.s32 0, 0
      %s46 = smul.u32 2, %s45
      %s48 = ssub.s32 256, 256
      %49 = vsyncadd [#allocation7], %s48
      %s50 = smul.addr %s46, 128
      %s51 = scalar_lea.hbm %s2, %s50
      %s52 = sshll.u32 [#allocation8], 4
      %s53 = int_to_ptr.vmem [resolvable:$true] %s52
      %58 = dma.hbm_to_vmem [thread:$0]  %s51, 256, %s53, [#allocation7], 128, 128, 8
    $region13: #{tpu_custom_call.1} parent=1 // pred_fallthru
      _
    // Predicated region
    $region14: #{tpu_custom_call.1} parent=1 // pred_check
      _
    $region15: #{tpu_custom_call.1} parent=1 // pred_check_branch
      %60 = sbr.rel (0) target = $region17
    $region16: #{tpu_custom_call.1} parent=1 // pred_region
      %61 = dma.done [#allocation4], 256
    $region17: #{tpu_custom_call.1} parent=1 // pred_fallthru
      _
    // Predicated region
    $region18: #{tpu_custom_call.1} parent=1 // pred_check
      _
    $region19: #{tpu_custom_call.1} parent=1 // pred_check_branch
      %63 = sbr.rel (0) target = $region21
    $region20: #{tpu_custom_call.1} parent=1 // pred_region
      %64 = dma.done [#allocation7], 256
    $region21: #{tpu_custom_call.1} parent=1 // pred_fallthru
      _
    // Predicated region
    $region22: #{tpu_custom_call.1} parent=1 // pred_check
      _
    $region23: #{tpu_custom_call.1} parent=1 // pred_check_branch
      %66 = sbr.rel (0) target = $region25
    $region24: #{tpu_custom_call.1} parent=1 // pred_region
      %67 = dma.done [#allocation7], 256
    $region25: #{tpu_custom_call.1} parent=1 // pred_fallthru
      _
    %s68 = sadd.s32 0, 0
    %s69 = smul.u32 2, %s68
    %s70 = sadd.s32 0, 0
    %s71 = smul.u32 2, %s70
    %s72 = sadd.s32 0, 0
    %s73 = smul.u32 2, %s72
    %p74 = scmp.eq.s32.totalorder 0, 0
    // Predicated region
    $region26: #{tpu_custom_call.1} parent=1 // pred_check
      %p75 = pneg %p74
    $region27: #{tpu_custom_call.1} parent=1 // pred_check_branch
      %77 = sbr.rel (%p75) target = $region29
    $region28: #{tpu_custom_call.1} parent=1 // pred_region
      %78 = vst [vmem:[#allocation2] sm:$0xff] 0.0
    $region29: #{tpu_custom_call.1} parent=1 // pred_fallthru
      _
    %v79 = vld [vmem:[#allocation3] sm:$0xff]
    %v80 = vld [vmem:[#allocation3 + $0x8] sm:$0xff]
    %v81 = vld [vmem:[#allocation6] sm:$0xff]
    %v82 = vld [vmem:[#allocation6 + $0x8] sm:$0xff]
    %v83 = vld [vmem:[#allocation8] sm:$0xff]
    %v84 = vld [vmem:[#allocation8 + $0x8] sm:$0xff]
    %v85 = vmul.f32 %v83, %v83
    %v86 = vmul.f32 %v84, %v84
    %v87 = vsub.f32 %v79, %v81
    %v88 = vsub.f32 %v80, %v82
    %v89 = vlog2.pop %v85
    %v90 = vmul.f32 %v89, 0.6931472
    %v91 = vlog2.pop %v86
    %v92 = vmul.f32 %v91, 0.6931472
    %v93 = vmul.f32 %v87, %v87
    %v94 = vmul.f32 %v88, %v88
    %v95 = vadd.f32 %v85, 1e-08
    %v96 = vadd.f32 %v86, 1e-08
    %v97 = vrcp.pop %v95
    %v98 = vrcp.pop %v96
    %v99 = vmul.f32 %v93, %v97
    %v100 = vmul.f32 %v94, %v98
    %v101 = vadd.f32 %v90, %v99
    %v102 = vadd.f32 %v92, %v100
    %v103 = vld [vmem:[#allocation2] sm:$0xff]
    %v104 = vadd.f32 %v101, %v102
    %v105 = vadd.f32 %v103, %v104
    %106 = vst [vmem:[#allocation2] sm:$0xff] %v105
    // Predicated region
    $region30: #{tpu_custom_call.1} parent=1 // pred_check
      %p107 = pneg %p74
    $region31: #{tpu_custom_call.1} parent=1 // pred_check_branch
      %109 = sbr.rel (%p107) target = $region33
    $region32: #{tpu_custom_call.1} parent=1 // pred_region
      %v110 = vld [vmem:[#allocation2] sm:$0xff]
      %111 = vadd.xlane.f32.xlu0 %v110
      %v112 = vpop.xlane.xlu0 %111
      %v113 = vrot.slane %v112, 4
      %v114 = vadd.f32 %v112, %v113
      %v115 = vrot.slane %v114, 2
      %v116 = vadd.f32 %v114, %v115
      %v117 = vrot.slane %v116, 1
      %v118 = vadd.f32 %v116, %v117
      %s119 = vtos %v118
      %s120 = smul.f32 %s119, 0.5
      %s121 = scalar_lea.smem [#allocation9], 0
      %122 = sst [smem:[%s121]] %s120
    $region33: #{tpu_custom_call.1} parent=1 // pred_fallthru
      _
    // Predicated region
    $region34: #{tpu_custom_call.1} parent=1 // pred_check
      _
    $region35: #{tpu_custom_call.1} parent=1 // pred_check_branch
      %124 = sbr.rel (0) target = $region37
    $region36: #{tpu_custom_call.1} parent=1 // pred_region
      %s126 = ssub.s32 16, 16
      %127 = vsyncadd [#allocation5], %s126
      %130 = dma.smem_to_hbm [#allocation9], 16, %s3, [#allocation5]
    $region37: #{tpu_custom_call.1} parent=1 // pred_fallthru
      _
    // Predicated region
    $region38: #{tpu_custom_call.1} parent=1 // pred_check
      _
    $region39: #{tpu_custom_call.1} parent=1 // pred_check_branch
      %132 = sbr.rel (0) target = $region41
    $region40: #{tpu_custom_call.1} parent=1 // pred_region
      %133 = dma.done [#allocation5], 16
    $region41: #{tpu_custom_call.1} parent=1 // pred_fallthru
      _
    %134 = sfence
    %135 = vsyncpa [#allocation4], 1
    %136 = vsyncpa [#allocation7], 1
    %137 = vsyncpa [#allocation5], 1

</llo_original>
